<compile_context>
chip_gen: v7x
topology: tpu7x:2x2x1
jax: 0.10.0
libtpu: 0.0.40
codegen_flags: <defaults>
</compile_context>

<pallas_src>
import jax
import jax.numpy as jnp
from jax.experimental import pallas as pl
from jax.experimental.pallas import tpu as pltpu

BN_EPS = 1e-5
LANE = 128


def _round_up(x, m):
    return ((x + m - 1) // m) * m


def _classblock_head_kernel(feats_ref, w1_ref, b1_ref, w2_ref, b2_ref,
                            out_ref, acc_ref):
    """One grid step = one lane-aligned C-tile of the (folded) first Linear.

    feats_ref : (B, S, Ct)  channel-last backbone features, C-tile c
    w1_ref    : (Ct, Lp)    folded W1' tile (BN affine and 1/S pre-folded; bf16)
    b1_ref    : (1, Lp)     folded b1' (f32, VMEM-resident)
    w2_ref    : (Lp, NCp)   classifier weight (bf16, class dim padded, resident)
    b2_ref    : (1, NCp)    classifier bias (f32, resident)
    out_ref   : (B, NCp)    logits (written once, at the last C step)
    acc_ref   : (B, Lp)     f32 VMEM accumulator for the first matmul
    """
    c = pl.program_id(0)

    @pl.when(c == 0)
    def _init():
        acc_ref[...] = jnp.zeros_like(acc_ref)

    # Global average pool folded to a sum over the spatial axis (the 1/S factor
    # lives in W1'/b1').  Sum in f32 (VPU/XLU), then feed the MXU in bf16.
    w1 = w1_ref[...]
    pooled = jnp.sum(feats_ref[...].astype(jnp.float32), axis=1)          # (B, Ct)
    acc_ref[...] += jnp.dot(pooled.astype(w1.dtype), w1,
                            preferred_element_type=jnp.float32)

    @pl.when(c == pl.num_programs(0) - 1)
    def _finalize():
        w2 = w2_ref[...]
        h = acc_ref[...] + b1_ref[...]        # Linear + BN(eval) folded; Dropout = id
        y = jnp.dot(h.astype(w2.dtype), w2,
                    preferred_element_type=jnp.float32) + b2_ref[...]
        out_ref[...] = y.astype(out_ref.dtype)


def prepare_head_params(params, *, spatial_size, c_tile=128,
                        weight_dtype=jnp.bfloat16):
    """One-time parameter prep: fold eval-mode BatchNorm1d and the 1/S of the global
    average pool into (W1, b1), cast both weight matrices to `weight_dtype`
    (bf16 halves the HBM weight stream), and zero-pad the reduction dim C, the
    hidden dim L and the class dim to lane-friendly multiples (all padding is
    zeros, so logits are unchanged)."""
    assert c_tile % LANE == 0
    w1, b1, gamma, beta, rmean, rvar, w2, b2 = params
    C, L = w1.shape
    NC = w2.shape[1]

    inv = gamma * jax.lax.rsqrt(rvar + BN_EPS)                  # (L,)
    w1f = (w1 * inv[None, :]) / float(spatial_size)             # fold BN scale + 1/S
    b1f = (b1 - rmean) * inv + beta                             # fold BN shift

    Cp = _round_up(C, c_tile)
    Lp = _round_up(L, LANE)
    NCp = _round_up(NC, LANE)
    w1f = jnp.pad(w1f, ((0, Cp - C), (0, Lp - L)))
    b1f = jnp.pad(b1f, ((0, Lp - L),))
    w2p = jnp.pad(w2, ((0, Lp - L), (0, NCp - NC)))
    b2p = jnp.pad(b2, ((0, NCp - NC),))

    return dict(
        w1=w1f.astype(weight_dtype),
        b1=b1f[None, :].astype(jnp.float32),
        w2=w2p.astype(weight_dtype),
        b2=b2p[None, :].astype(jnp.float32),
        C=C, Cp=Cp, L=L, Lp=Lp, NC=NC, NCp=NCp, c_tile=c_tile,
    )


def ft_net_nas_head(feats, prep):
    """feats: (B, S, C) channel-last, spatially-flattened backbone feature map.
    Returns (B, class_num) logits = AdaptiveAvgPool2d((1,1)) + view + ClassBlock
    (Linear -> BatchNorm1d eval -> Dropout(identity) -> Linear)."""
    B, S, C = feats.shape
    assert C == prep["C"]
    Cp, Lp, NC, NCp, c_tile = (prep["Cp"], prep["Lp"], prep["NC"],
                               prep["NCp"], prep["c_tile"])
    w1, b1, w2, b2 = prep["w1"], prep["b1"], prep["w2"], prep["b2"]

    if Cp != C:
        feats = jnp.pad(feats, ((0, 0), (0, 0), (0, Cp - C)))   # zero pad: exact
    num_c = Cp // c_tile

    flops = int(2 * B * Cp * Lp + 2 * B * Lp * NCp + B * S * Cp)
    bytes_accessed = int(
        feats.size * feats.dtype.itemsize
        + w1.size * w1.dtype.itemsize + b1.size * b1.dtype.itemsize
        + w2.size * w2.dtype.itemsize + b2.size * b2.dtype.itemsize
        + B * NCp * 4)

    grid_spec = pltpu.PrefetchScalarGridSpec(
        num_scalar_prefetch=0,
        grid=(num_c,),
        in_specs=[
            pl.BlockSpec((B, S, c_tile), lambda c: (0, 0, c)),   # feature C-tile
            pl.BlockSpec((c_tile, Lp),   lambda c: (c, 0)),      # folded W1 C-tile (bf16)
            pl.BlockSpec((1, Lp),        lambda c: (0, 0)),      # folded b1 (resident)
            pl.BlockSpec((Lp, NCp),      lambda c: (0, 0)),      # W2 (resident, bf16)
            pl.BlockSpec((1, NCp),       lambda c: (0, 0)),      # b2 (resident)
        ],
        out_specs=pl.BlockSpec((B, NCp), lambda c: (0, 0)),      # logits (resident)
        scratch_shapes=[pltpu.VMEM((B, Lp), jnp.float32)],
    )

    out = pl.pallas_call(
        _classblock_head_kernel,
        out_shape=jax.ShapeDtypeStruct((B, NCp), jnp.float32),
        grid_spec=grid_spec,
        compiler_params=pltpu.CompilerParams(
            dimension_semantics=("arbitrary",)),                 # C is a reduction axis
        cost_estimate=pl.CostEstimate(
            flops=flops, transcendentals=0, bytes_accessed=bytes_accessed),
    )(feats, w1, b1, w2, b2)

    return out[:, :NC]


def init_params(key, C, L, NC):
    """In-script params mirroring the module's init: kaiming fan_out for the first
    Linear, BN gamma~N(1,0.02), classifier Linear std=0.001, zero biases.  BN running
    stats are given non-trivial values to actually exercise the eval-BN fold."""
    k1, k2, k3, k4, k5 = jax.random.split(key, 5)
    w1 = jax.random.normal(k1, (C, L), jnp.float32) * jnp.sqrt(2.0 / L)
    b1 = jnp.zeros((L,), jnp.float32)
    gamma = 1.0 + 0.02 * jax.random.normal(k2, (L,), jnp.float32)
    beta = jnp.zeros((L,), jnp.float32)
    rmean = 0.1 * jax.random.normal(k3, (L,), jnp.float32)
    rvar = 0.5 + jax.random.uniform(k4, (L,), jnp.float32)
    w2 = 0.001 * jax.random.normal(k5, (L, NC), jnp.float32)
    b2 = jnp.zeros((NC,), jnp.float32)
    return (w1, b1, gamma, beta, rmean, rvar, w2, b2)


def _reference_head(feats, params):
    """Pure-JAX, full-precision reference of the module semantics
    (avg pool -> Linear -> BN1d eval -> Dropout(id) -> Linear)."""
    w1, b1, gamma, beta, rmean, rvar, w2, b2 = params
    pooled = jnp.mean(feats.astype(jnp.float32), axis=1)                  # (B, C)
    h = jnp.dot(pooled, w1, precision=jax.lax.Precision.HIGHEST) + b1
    h = (h - rmean) * gamma * jax.lax.rsqrt(rvar + BN_EPS) + beta
    return jnp.dot(h, w2, precision=jax.lax.Precision.HIGHEST) + b2


if __name__ == "__main__":
    key = jax.random.PRNGKey(0)
    kf, kp = jax.random.split(key)

    # Small shapes consistent with the module (real: C=4032, L=512, NC~700, S=121).
    # C=200 exercises both lane padding (->256) and the 2-step C-reduction grid;
    # L=32 / NC=10 exercise the zero-padding of the hidden and class dims to 128.
    B, H, W, C, L, NC = 2, 4, 4, 200, 32, 10
    S = H * W

    feats = jax.random.normal(kf, (B, S, C), jnp.float32)   # backbone feature map
    params = init_params(kp, C, L, NC)

    prep = prepare_head_params(params, spatial_size=S, c_tile=128,
                               weight_dtype=jnp.bfloat16)
    y = ft_net_nas_head(feats, prep)
    y = jax.block_until_ready(y)

    y_ref = _reference_head(feats, params)
    assert y.shape == (B, NC)
    # Tolerance reflects the bf16 weight streaming (f32 accumulation on the MXU).
    assert jnp.allclose(y, y_ref, rtol=5e-2, atol=1e-3), \
        float(jnp.max(jnp.abs(y - y_ref)))

    print("KERNEL_OK")
</pallas_src>

<mosaic_0001>
module attributes {stable_mosaic.version = 11 : i64} {
  func.func @_classblock_head_kernel(%arg0: i32, %arg1: memref<2x16x128xf32, #tpu.memory_space<vmem>>, %arg2: memref<128x128xbf16, #tpu.memory_space<vmem>>, %arg3: memref<1x128xf32, #tpu.memory_space<vmem>>, %arg4: memref<128x128xbf16, #tpu.memory_space<vmem>>, %arg5: memref<1x128xf32, #tpu.memory_space<vmem>>, %arg6: memref<2x128xf32, #tpu.memory_space<vmem>>, %arg7: memref<2x128xf32, #tpu.memory_space<vmem>>) attributes {dimension_semantics = [#tpu.dimension_semantics<arbitrary>], iteration_bounds = array<i64: 2>, scalar_prefetch = 0 : i64, scratch_operands = 1 : i64, tpu.core_type = #tpu.core_type<tc>, window_params = [{transform_indices = @transform_0, window_bounds = array<i64: 2, 16, 128>}, {transform_indices = @transform_1, window_bounds = array<i64: 128, 128>}, {pipeline_mode = #tpu.pipeline_mode<synchronous>, transform_indices = @transform_2, window_bounds = array<i64: 1, 128>}, {pipeline_mode = #tpu.pipeline_mode<synchronous>, transform_indices = @transform_3, window_bounds = array<i64: 128, 128>}, {pipeline_mode = #tpu.pipeline_mode<synchronous>, transform_indices = @transform_4, window_bounds = array<i64: 1, 128>}, {pipeline_mode = #tpu.pipeline_mode<synchronous>, transform_indices = @transform_5, window_bounds = array<i64: 2, 128>}]} {
    %c0_i32 = arith.constant 0 : i32
    %0 = arith.cmpi eq, %arg0, %c0_i32 : i32
    %1 = arith.extui %0 : i1 to i32
    %c0_i32_0 = arith.constant 0 : i32
    %2 = arith.cmpi ne, %1, %c0_i32_0 : i32
    scf.if %2 {
      %cst_11 = arith.constant 0.000000e+00 : f32
      %14 = vector.broadcast %cst_11 : f32 to vector<2x128xf32>
      %c0_12 = arith.constant 0 : index
      %c0_13 = arith.constant 0 : index
      %15 = vector.load %arg7[%c0_12, %c0_13] : memref<2x128xf32, #tpu.memory_space<vmem>>, vector<2x128xf32>
      tpu.vector_store %arg7[%c0_12, %c0_13], %14 {strides = array<i32>} : memref<2x128xf32, #tpu.memory_space<vmem>>, vector<2x128xf32>,
    } else {
    }
    %c0 = arith.constant 0 : index
    %c0_1 = arith.constant 0 : index
    %3 = vector.load %arg2[%c0, %c0_1] : memref<128x128xbf16, #tpu.memory_space<vmem>>, vector<128x128xbf16>
    %c0_2 = arith.constant 0 : index
    %c0_3 = arith.constant 0 : index
    %c0_4 = arith.constant 0 : index
    %4 = vector.load %arg1[%c0_2, %c0_3, %c0_4] : memref<2x16x128xf32, #tpu.memory_space<vmem>>, vector<2x16x128xf32>
    %cst = arith.constant dense<0.000000e+00> : vector<2x128xf32>
    %5 = vector.multi_reduction <add>, %4, %cst [1] : vector<2x16x128xf32> to vector<2x128xf32>
    %c0_5 = arith.constant 0 : index
    %c0_6 = arith.constant 0 : index
    %6 = vector.load %arg7[%c0_5, %c0_6] : memref<2x128xf32, #tpu.memory_space<vmem>>, vector<2x128xf32>
    %7 = arith.truncf %5 : vector<2x128xf32> to vector<2x128xbf16>
    %cst_7 = arith.constant dense<0.000000e+00> : vector<2x128xf32>
    %8 = tpu.matmul %7, %3, %cst_7 {dimension_numbers = #tpu.dot_dimension_numbers<[1], [0], [0], [1], [0, 0, 1, 1], [], []>} : vector<2x128xbf16>, vector<128x128xbf16>, vector<2x128xf32> -> vector<2x128xf32>
    %9 = arith.addf %6, %8 : vector<2x128xf32>
    %c0_8 = arith.constant 0 : index
    %c0_9 = arith.constant 0 : index
    %10 = vector.load %arg7[%c0_8, %c0_9] : memref<2x128xf32, #tpu.memory_space<vmem>>, vector<2x128xf32>
    tpu.vector_store %arg7[%c0_8, %c0_9], %9 {strides = array<i32>} : memref<2x128xf32, #tpu.memory_space<vmem>>, vector<2x128xf32>,
    %c1_i32 = arith.constant 1 : i32
    %11 = arith.cmpi eq, %arg0, %c1_i32 : i32
    %12 = arith.extui %11 : i1 to i32
    %c0_i32_10 = arith.constant 0 : i32
    %13 = arith.cmpi ne, %12, %c0_i32_10 : i32
    scf.if %13 {
      %c0_11 = arith.constant 0 : index
      %c0_12 = arith.constant 0 : index
      %14 = vector.load %arg4[%c0_11, %c0_12] : memref<128x128xbf16, #tpu.memory_space<vmem>>, vector<128x128xbf16>
      %c0_13 = arith.constant 0 : index
      %c0_14 = arith.constant 0 : index
      %15 = vector.load %arg7[%c0_13, %c0_14] : memref<2x128xf32, #tpu.memory_space<vmem>>, vector<2x128xf32>
      %c0_15 = arith.constant 0 : index
      %c0_16 = arith.constant 0 : index
      %16 = vector.load %arg3[%c0_15, %c0_16] : memref<1x128xf32, #tpu.memory_space<vmem>>, vector<1x128xf32>
      %17 = vector.broadcast %16 : vector<1x128xf32> to vector<2x128xf32>
      %18 = arith.addf %15, %17 : vector<2x128xf32>
      %19 = arith.truncf %18 : vector<2x128xf32> to vector<2x128xbf16>
      %cst_17 = arith.constant dense<0.000000e+00> : vector<2x128xf32>
      %20 = tpu.matmul %19, %14, %cst_17 {dimension_numbers = #tpu.dot_dimension_numbers<[1], [0], [0], [1], [0, 0, 1, 1], [], []>} : vector<2x128xbf16>, vector<128x128xbf16>, vector<2x128xf32> -> vector<2x128xf32>
      %c0_18 = arith.constant 0 : index
      %c0_19 = arith.constant 0 : index
      %21 = vector.load %arg5[%c0_18, %c0_19] : memref<1x128xf32, #tpu.memory_space<vmem>>, vector<1x128xf32>
      %22 = vector.broadcast %21 : vector<1x128xf32> to vector<2x128xf32>
      %23 = arith.addf %20, %22 : vector<2x128xf32>
      %c0_20 = arith.constant 0 : index
      %c0_21 = arith.constant 0 : index
      %24 = vector.load %arg6[%c0_20, %c0_21] : memref<2x128xf32, #tpu.memory_space<vmem>>, vector<2x128xf32>
      tpu.vector_store %arg6[%c0_20, %c0_21], %23 {strides = array<i32>} : memref<2x128xf32, #tpu.memory_space<vmem>>, vector<2x128xf32>,
    } else {
    }
    return
  }
  func.func @transform_0(%arg0: i32) -> (i32, i32, i32) {
    %c0_i32 = arith.constant 0 : i32
    %c0_i32_0 = arith.constant 0 : i32
    %c0_i32_1 = arith.constant 0 : i32
    return %c0_i32, %c0_i32_0, %arg0 : i32, i32, i32
  }
  func.func @transform_1(%arg0: i32) -> (i32, i32) {
    %c0_i32 = arith.constant 0 : i32
    %c0_i32_0 = arith.constant 0 : i32
    return %arg0, %c0_i32 : i32, i32
  }
  func.func @transform_2(%arg0: i32) -> (i32, i32) {
    %c0_i32 = arith.constant 0 : i32
    %c0_i32_0 = arith.constant 0 : i32
    %c0_i32_1 = arith.constant 0 : i32
    return %c0_i32, %c0_i32_0 : i32, i32
  }
  func.func @transform_3(%arg0: i32) -> (i32, i32) {
    %c0_i32 = arith.constant 0 : i32
    %c0_i32_0 = arith.constant 0 : i32
    %c0_i32_1 = arith.constant 0 : i32
    return %c0_i32, %c0_i32_0 : i32, i32
  }
  func.func @transform_4(%arg0: i32) -> (i32, i32) {
    %c0_i32 = arith.constant 0 : i32
    %c0_i32_0 = arith.constant 0 : i32
    %c0_i32_1 = arith.constant 0 : i32
    return %c0_i32, %c0_i32_0 : i32, i32
  }
  func.func @transform_5(%arg0: i32) -> (i32, i32) {
    %c0_i32 = arith.constant 0 : i32
    %c0_i32_0 = arith.constant 0 : i32
    %c0_i32_1 = arith.constant 0 : i32
    return %c0_i32, %c0_i32_0 : i32, i32
  }
}

</mosaic_0001>

<llo_original>
// kernel: tpu_custom_call.1
$region0: #{tpu_custom_call.1}
  #allocation0 [shape = 'u32[]', space=smem, size = 0x4, offset = 0x4, fixed_abs, tag = 'smem constant byte address 0x4 - core index']
  #allocation1 [shape = 'u32[144,128]{1,0:T(1,128)}', space=vmem, size = 0x12000, scoped, tag = 'internal scratch']
  #allocation2 [shape = 'f32[2,128]{1,0:T(2,128)}', space=vmem, size = 0x400, scoped, tag = 'scratch operand']
  %s0 = inlined_call_operand.hbm [shape: f32[2,16,256], index: 0, kind: input, shape index: {}]
  %s1 = inlined_call_operand.hbm [shape: bf16[256,128], index: 1, kind: input, shape index: {}]
  %s2 = inlined_call_operand.vmem [shape: f32[1,128], index: 2, kind: input, shape index: {}]
  %s3 = inlined_call_operand.hbm [shape: bf16[128,128], index: 3, kind: input, shape index: {}]
  %s4 = inlined_call_operand.vmem [shape: f32[1,128], index: 4, kind: input, shape index: {}]
  %s5 = inlined_call_operand.hbm [shape: f32[2,128], index: 5, kind: output, shape index: {}]
  %s6 = sld [smem:[#allocation0]]
  $region73: #{tpu_custom_call.1} parent=0
    _
  %s8 = ssub.s32 1, %s6
  %s9 = scalar_select 0, %s8, %s6
  $region1: #{tpu_custom_call.1} parent=0
    #allocation3 [shape = 'u8[32768]{0}', space=vmem, size = 0x8000, scoped, tag = 'input window, operand 0']
    #allocation4 [shape = 's32[2]{0}', space=sflag, size = 0x8, scoped, tag = 'scoped memory for tpu_custom_call.1']
    #allocation5 [shape = 's32[2]{0}', space=sflag, size = 0x8, scoped, tag = 'scoped memory for tpu_custom_call.1']
    #allocation6 [shape = 'u8[65536]{0}', space=vmem, size = 0x10000, scoped, tag = 'input window, operand 1']
    #allocation7 [shape = 's32[2]{0}', space=sflag, size = 0x8, scoped, tag = 'scoped memory for tpu_custom_call.1']
    #allocation8 [shape = 'u8[32768]{0}', space=vmem, size = 0x8000, scoped, tag = 'input window, operand 3, single buffered']
    #allocation9 [shape = 'u8[1024]{0}', space=vmem, size = 0x400, scoped, tag = 'output window, operand 0, single buffered']
    %10 = vsyncpa [#allocation4], 0
    %s11 = scalar_lea.sflag [#allocation4], 1
    %12 = vsyncpa %s11, 0
    %13 = vsyncpa [#allocation7], 0
    %s14 = scalar_lea.sflag [#allocation7], 1
    %15 = vsyncpa %s14, 0
    %16 = vsyncpa [#allocation5], 0
    loop: start=0, step=1, limit=4
    $region2: #{tpu_custom_call.1} parent=1 // loop_pre_header
      _
    $region3: #{tpu_custom_call.1} parent=1 // loop_header
      %s18 = sphi 0, %s22
      %p19 = scmp.ge.s32.totalorder %s18, 4
      %s28 = sphi 0, %s30
      %s31 = sphi 0, %s28
      %s32 = sphi 0, %s31
      %s48 = sphi 0, %s32
      %s54 = sphi 0, %s56
      %s57 = sphi 0, %s54
      %s58 = sphi 0, %s57
      %s74 = sphi 0, %s58
      %s78 = sphi 0, %s78
      %s80 = sphi 0, %s78
      %s81 = sphi 0, %s80
      %s95 = sphi 0, %s81
      %s99 = sphi 0, %s99
      %s101 = sphi 0, %s99
      %s102 = sphi 0, %s101
      %s116 = sphi 0, %s102
      %s120 = sphi 0, %s120
      %s122 = sphi 0, %s120
      %s123 = sphi 0, %s122
      %s137 = sphi 0, %s123
      %s141 = sphi 0, %s141
      %s143 = sphi 0, %s141
      %s144 = sphi 0, %s143
      %s158 = sphi 0, %s144
    $region4: #{tpu_custom_call.1} parent=1 // loop_header_branch
      %21 = sbr.rel (%p19) target = $region8
    $region5: #{tpu_custom_call.1} parent=1 // loop_body
      %s23 = ssub.s32 %s18, 1
      %s24 = ssub.s32 %s18, 2
      %s25 = sadd.s32 %s18, 1
      %s26 = ssub.s32 %s18, %s25
      %p27 = scmp.eq.s32.totalorder %s26, 0
      %s29 = sadd.s32 %s28, 1
      %s30 = scalar_select %p27, %s28, %s29
      %p33 = pneg %p27
      %p34 = scmp.eq.s32.totalorder %s18, 1
      %p35 = por %p33, %p34
      %p36 = scmp.ne.s32.totalorder %s28, %s31
      %p37 = scmp.eq.s32.totalorder %s18, 0
      %p38 = por %p36, %p37
      %p39 = scmp.ne.s32.totalorder %s28, %s31
      %p40 = scmp.eq.s32.totalorder %s23, 1
      %p41 = por %p39, %p40
      %p42 = scmp.ne.s32.totalorder %s31, %s32
      %p43 = scmp.eq.s32.totalorder %s23, 0
      %p44 = por %p42, %p43
      %p45 = scmp.ne.s32.totalorder %s31, %s32
      %p46 = scmp.eq.s32.totalorder %s24, 1
      %p47 = por %p45, %p46
      %p49 = scmp.ne.s32.totalorder %s32, %s48
      %p50 = scmp.eq.s32.totalorder %s24, 0
      %p51 = por %p49, %p50
      %s52 = ssub.s32 %s18, %s25
      %p53 = scmp.eq.s32.totalorder %s52, 0
      %s55 = sadd.s32 %s54, 1
      %s56 = scalar_select %p53, %s54, %s55
      %p59 = pneg %p53
      %p60 = scmp.eq.s32.totalorder %s18, 1
      %p61 = por %p59, %p60
      %p62 = scmp.ne.s32.totalorder %s54, %s57
      %p63 = scmp.eq.s32.totalorder %s18, 0
      %p64 = por %p62, %p63
      %p65 = scmp.ne.s32.totalorder %s54, %s57
      %p66 = scmp.eq.s32.totalorder %s23, 1
      %p67 = por %p65, %p66
      %p68 = scmp.ne.s32.totalorder %s57, %s58
      %p69 = scmp.eq.s32.totalorder %s23, 0
      %p70 = por %p68, %p69
      %p71 = scmp.ne.s32.totalorder %s57, %s58
      %p72 = scmp.eq.s32.totalorder %s24, 1
      %p73 = por %p71, %p72
      %p75 = scmp.ne.s32.totalorder %s58, %s74
      %p76 = scmp.eq.s32.totalorder %s24, 0
      %p77 = por %p75, %p76
      %s79 = sadd.s32 %s78, 1
      %p82 = scmp.eq.s32.totalorder %s18, 1
      %p83 = scmp.ne.s32.totalorder %s78, %s80
      %p84 = scmp.eq.s32.totalorder %s18, 0
      %p85 = por %p83, %p84
      %p86 = scmp.ne.s32.totalorder %s78, %s80
      %p87 = scmp.eq.s32.totalorder %s23, 1
      %p88 = por %p86, %p87
      %p89 = scmp.ne.s32.totalorder %s80, %s81
      %p90 = scmp.eq.s32.totalorder %s23, 0
      %p91 = por %p89, %p90
      %p92 = scmp.ne.s32.totalorder %s80, %s81
      %p93 = scmp.eq.s32.totalorder %s24, 1
      %p94 = por %p92, %p93
      %p96 = scmp.ne.s32.totalorder %s81, %s95
      %p97 = scmp.eq.s32.totalorder %s24, 0
      %p98 = por %p96, %p97
      %s100 = sadd.s32 %s99, 1
      %p103 = scmp.eq.s32.totalorder %s18, 1
      %p104 = scmp.ne.s32.totalorder %s99, %s101
      %p105 = scmp.eq.s32.totalorder %s18, 0
      %p106 = por %p104, %p105
      %p107 = scmp.ne.s32.totalorder %s99, %s101
      %p108 = scmp.eq.s32.totalorder %s23, 1
      %p109 = por %p107, %p108
      %p110 = scmp.ne.s32.totalorder %s101, %s102
      %p111 = scmp.eq.s32.totalorder %s23, 0
      %p112 = por %p110, %p111
      %p113 = scmp.ne.s32.totalorder %s101, %s102
      %p114 = scmp.eq.s32.totalorder %s24, 1
      %p115 = por %p113, %p114
      %p117 = scmp.ne.s32.totalorder %s102, %s116
      %p118 = scmp.eq.s32.totalorder %s24, 0
      %p119 = por %p117, %p118
      %s121 = sadd.s32 %s120, 1
      %p124 = scmp.eq.s32.totalorder %s18, 1
      %p125 = scmp.ne.s32.totalorder %s120, %s122
      %p126 = scmp.eq.s32.totalorder %s18, 0
      %p127 = por %p125, %p126
      %p128 = scmp.ne.s32.totalorder %s120, %s122
      %p129 = scmp.eq.s32.totalorder %s23, 1
      %p130 = por %p128, %p129
      %p131 = scmp.ne.s32.totalorder %s122, %s123
      %p132 = scmp.eq.s32.totalorder %s23, 0
      %p133 = por %p131, %p132
      %p134 = scmp.ne.s32.totalorder %s122, %s123
      %p135 = scmp.eq.s32.totalorder %s24, 1
      %p136 = por %p134, %p135
      %p138 = scmp.ne.s32.totalorder %s123, %s137
      %p139 = scmp.eq.s32.totalorder %s24, 0
      %p140 = por %p138, %p139
      %s142 = sadd.s32 %s141, 1
      %p145 = scmp.eq.s32.totalorder %s18, 1
      %p146 = scmp.ne.s32.totalorder %s141, %s143
      %p147 = scmp.eq.s32.totalorder %s18, 0
      %p148 = por %p146, %p147
      %p149 = scmp.ne.s32.totalorder %s141, %s143
      %p150 = scmp.eq.s32.totalorder %s23, 1
      %p151 = por %p149, %p150
      %p152 = scmp.ne.s32.totalorder %s143, %s144
      %p153 = scmp.eq.s32.totalorder %s23, 0
      %p154 = por %p152, %p153
      %p155 = scmp.ne.s32.totalorder %s143, %s144
      %p156 = scmp.eq.s32.totalorder %s24, 1
      %p157 = por %p155, %p156
      %p159 = scmp.ne.s32.totalorder %s144, %s158
      %p160 = scmp.eq.s32.totalorder %s24, 0
      %p161 = por %p159, %p160
      %p162 = scmp.le.s32.totalorder 1, %s18
      %p163 = scmp.lt.s32.totalorder %s18, 3
      %p164 = pnand %p162, %p163
      %p165 = pneg %p164
      // Predicated region
      $region9: #{tpu_custom_call.1} parent=5 // pred_check
        _
      $region10: #{tpu_custom_call.1} parent=5 // pred_check_branch
        %167 = sbr.rel (%p164) target = $region12
      $region11: #{tpu_custom_call.1} parent=5 // pred_region
        %s168 = ssub.s32 %s18, 1
        // Predicated region
        $region13: #{tpu_custom_call.1} parent=11 // pred_check
          %p169 = pneg %p91
        $region14: #{tpu_custom_call.1} parent=11 // pred_check_branch
          %171 = sbr.rel (%p169) target = $region16
        $region15: #{tpu_custom_call.1} parent=11 // pred_region
          _
        $region16: #{tpu_custom_call.1} parent=11 // pred_fallthru
          _
        // Predicated region
        $region17: #{tpu_custom_call.1} parent=11 // pred_check
          %p172 = pneg %p112
        $region18: #{tpu_custom_call.1} parent=11 // pred_check_branch
          %174 = sbr.rel (%p172) target = $region20
        $region19: #{tpu_custom_call.1} parent=11 // pred_region
          %s176 = ssub.s32 1024, 1024
          %177 = vsyncadd [#allocation7], %s176
          %s178 = sshll.u32 [#allocation8], 4
          %s179 = int_to_ptr.vmem [resolvable:$true] %s178
          %184 = dma.hbm_to_vmem [thread:$0]  %s3, 1024, %s179, [#allocation7], 64, 64, 4
        $region20: #{tpu_custom_call.1} parent=11 // pred_fallthru
          _
        // Predicated region
        $region21: #{tpu_custom_call.1} parent=11 // pred_check
          %p185 = pneg %p133
        $region22: #{tpu_custom_call.1} parent=11 // pred_check_branch
          %187 = sbr.rel (%p185) target = $region24
        $region23: #{tpu_custom_call.1} parent=11 // pred_region
          _
        $region24: #{tpu_custom_call.1} parent=11 // pred_fallthru
          _
      $region12: #{tpu_custom_call.1} parent=5 // pred_fallthru
        _
      %p188 = scmp.lt.s32.totalorder %s18, 2
      // Predicated region
      $region25: #{tpu_custom_call.1} parent=5 // pred_check
        %p189 = pneg %p188
      $region26: #{tpu_custom_call.1} parent=5 // pred_check_branch
        %191 = sbr.rel (%p189) target = $region28
      $region27: #{tpu_custom_call.1} parent=5 // pred_region
        // Predicated region
        $region29: #{tpu_custom_call.1} parent=27 // pred_check
          %p192 = pneg %p38
        $region30: #{tpu_custom_call.1} parent=27 // pred_check_branch
          %194 = sbr.rel (%p192) target = $region32
        $region31: #{tpu_custom_call.1} parent=27 // pred_region
          %s195 = sand.u32 %s28, 1
          %s196 = scalar_lea.sflag [#allocation4], %s195
          %s197 = sand.u32 %s28, 1
          %s198 = smul.addr %s197, 32
          %s199 = scalar_lea.vmem [#allocation3], %s198
          %s201 = ssub.s32 512, 512
          %202 = vsyncadd %s196, %s201
          %s203 = smul.addr %s18, 128
          %s204 = scalar_lea.hbm %s0, %s203
          %s205 = sshll.u32 %s199, 4
          %s206 = int_to_ptr.vmem [resolvable:$true] %s205
          %211 = dma.hbm_to_vmem [thread:$0]  %s204, 512, %s206, %s196, 256, 128, 8
        $region32: #{tpu_custom_call.1} parent=27 // pred_fallthru
          _
        // Predicated region
        $region33: #{tpu_custom_call.1} parent=27 // pred_check
          %p212 = pneg %p64
        $region34: #{tpu_custom_call.1} parent=27 // pred_check_branch
          %214 = sbr.rel (%p212) target = $region36
        $region35: #{tpu_custom_call.1} parent=27 // pred_region
          %s215 = sand.u32 %s18, 1
          %s216 = scalar_lea.sflag [#allocation7], %s215
          %s217 = sand.u32 %s54, 1
          %s218 = smul.addr %s217, 64
          %s219 = scalar_lea.vmem [#allocation6], %s218
          %s220 = smul.u32 16, %s18
          %s222 = ssub.s32 1024, 1024
          %223 = vsyncadd %s216, %s222
          %s224 = smul.addr %s220, 64
          %s225 = scalar_lea.hbm %s1, %s224
          %s226 = sshll.u32 %s219, 4
          %s227 = int_to_ptr.vmem [resolvable:$true] %s226
          %232 = dma.hbm_to_vmem [thread:$0]  %s225, 1024, %s227, %s216, 64, 64, 4
        $region36: #{tpu_custom_call.1} parent=27 // pred_fallthru
          _
      $region28: #{tpu_custom_call.1} parent=5 // pred_fallthru
        _
      %p233 = scmp.le.s32.totalorder 1, %s18
      %p234 = scmp.lt.s32.totalorder %s18, 3
      %p235 = pnand %p233, %p234
      %p236 = pneg %p235
      // Predicated region
      $region37: #{tpu_custom_call.1} parent=5 // pred_check
        _
      $region38: #{tpu_custom_call.1} parent=5 // pred_check_branch
        %238 = sbr.rel (%p235) target = $region40
      $region39: #{tpu_custom_call.1} parent=5 // pred_region
        %s239 = ssub.s32 %s18, 1
        %s240 = sand.u32 %s31, 1
        %s241 = scalar_lea.sflag [#allocation4], %s240
        %s242 = sand.u32 %s31, 1
        %s243 = smul.addr %s242, 32
        %s244 = scalar_lea.vmem [#allocation3], %s243
        // Predicated region
        $region41: #{tpu_custom_call.1} parent=39 // pred_check
          %p245 = pneg %p44
        $region42: #{tpu_custom_call.1} parent=39 // pred_check_branch
          %247 = sbr.rel (%p245) target = $region44
        $region43: #{tpu_custom_call.1} parent=39 // pred_region
          %248 = dma.done %s241, 512
        $region44: #{tpu_custom_call.1} parent=39 // pred_fallthru
          _
        %s249 = sand.u32 %s23, 1
        %s250 = scalar_lea.sflag [#allocation7], %s249
        %s251 = sand.u32 %s57, 1
        %s252 = smul.addr %s251, 64
        %s253 = scalar_lea.vmem [#allocation6], %s252
        // Predicated region
        $region45: #{tpu_custom_call.1} parent=39 // pred_check
          %p254 = pneg %p70
        $region46: #{tpu_custom_call.1} parent=39 // pred_check_branch
          %256 = sbr.rel (%p254) target = $region48
        $region47: #{tpu_custom_call.1} parent=39 // pred_region
          %257 = dma.done %s250, 1024
        $region48: #{tpu_custom_call.1} parent=39 // pred_fallthru
          _
        // Predicated region
        $region49: #{tpu_custom_call.1} parent=39 // pred_check
          %p258 = pneg %p112
        $region50: #{tpu_custom_call.1} parent=39 // pred_check_branch
          %260 = sbr.rel (%p258) target = $region52
        $region51: #{tpu_custom_call.1} parent=39 // pred_region
          %261 = dma.done [#allocation7], 1024
        $region52: #{tpu_custom_call.1} parent=39 // pred_fallthru
          _
        %s262 = sand.u32 %s31, 1
        %s263 = scalar_lea.sflag [#allocation4], %s262
        %s264 = sand.u32 %s31, 1
        %s265 = smul.addr %s264, 32
        %s266 = scalar_lea.vmem [#allocation3], %s265
        %p267 = pneg %p44
        %p268 = pneg %p41
        %s269 = sand.u32 %s23, 1
        %s270 = scalar_lea.sflag [#allocation7], %s269
        %s271 = sand.u32 %s57, 1
        %s272 = smul.addr %s271, 64
        %s273 = scalar_lea.vmem [#allocation6], %s272
        %p274 = pneg %p70
        %p275 = pneg %p67
        %p276 = pneg %p91
        %p277 = pneg %p88
        %p278 = pneg %p112
        %p279 = pneg %p109
        %p280 = pneg %p133
        %p281 = pneg %p130
        %p282 = pneg %p154
        %p283 = pneg %p151
        %s284 = smul.u32 16, %s23
        %p286 = scmp.eq.s32.totalorder %s23, 0
        // Predicated region
        $region53: #{tpu_custom_call.1} parent=39 // pred_check
          %p287 = pneg %p286
        $region54: #{tpu_custom_call.1} parent=39 // pred_check_branch
          %289 = sbr.rel (%p287) target = $region56
        $region55: #{tpu_custom_call.1} parent=39 // pred_region
          %290 = vst [vmem:[#allocation2] sm:$0x3] 0.0
        $region56: #{tpu_custom_call.1} parent=39 // pred_fallthru
          _
        %v291 = vld [vmem:[%s253] sm:$0xf]
        %v292 = vld [vmem:[%s253 + $0x4] sm:$0xf]
        %v293 = vld [vmem:[%s253 + $0x8] sm:$0xf]
        %v294 = vld [vmem:[%s253 + $0xc] sm:$0xf]
        %v295 = vld [vmem:[%s253 + $0x10] sm:$0xf]
        %v296 = vld [vmem:[%s253 + $0x14] sm:$0xf]
        %v297 = vld [vmem:[%s253 + $0x18] sm:$0xf]
        %v298 = vld [vmem:[%s253 + $0x1c] sm:$0xf]
        %v299 = vld [vmem:[%s253 + $0x20] sm:$0xf]
        %v300 = vld [vmem:[%s253 + $0x24] sm:$0xf]
        %v301 = vld [vmem:[%s253 + $0x28] sm:$0xf]
        %v302 = vld [vmem:[%s253 + $0x2c] sm:$0xf]
        %v303 = vld [vmem:[%s253 + $0x30] sm:$0xf]
        %v304 = vld [vmem:[%s253 + $0x34] sm:$0xf]
        %v305 = vld [vmem:[%s253 + $0x38] sm:$0xf]
        %v306 = vld [vmem:[%s253 + $0x3c] sm:$0xf]
        %v307 = vld [vmem:[%s244] sm:$0xff]
        %v308 = vld [vmem:[%s244 + $0x8] sm:$0xff]
        %v309 = vld [vmem:[%s244 + $0x10] sm:$0xff]
        %v310 = vld [vmem:[%s244 + $0x18] sm:$0xff]
        %v311 = vadd.f32 %v307, %v308
        %v312 = vrot.slane %v311, 4
        %v313 = vadd.f32 %v311, %v312
        %v314 = vrot.slane %v313, 2
        %v315 = vadd.f32 %v313, %v314
        %v316 = vrot.slane %v315, 1
        %v317 = vadd.f32 %v315, %v316
        %v318 = vadd.f32 %v309, %v310
        %v319 = vrot.slane %v318, 4
        %v320 = vadd.f32 %v318, %v319
        %v321 = vrot.slane %v320, 2
        %v322 = vadd.f32 %v320, %v321
        %v323 = vrot.slane %v322, 1
        %v324 = vadd.f32 %v322, %v323
        %v325 = vld [vmem:[#allocation2] sm:$0x3]
        %v326 = vpack.c.bf16 %v317, %v317
        %v327 = vpack.c.bf16 %v324, %v324
        %v330 = vunpack.c.l.b16 %v326
        %v331 = vunpack.c.l.b16 %v327
        %vm332 = vcmask 1041409
        %v333 = vsel %vm332, %v331, %v330
        %v334 = vpack.c.b16 %v333, %v333
        %v352 = vunpack.c.l.b16 %v291
        %v353 = vunpack.c.l.b16 %v292
        %v354 = vunpack.c.l.b16 %v293
        %v355 = vunpack.c.l.b16 %v294
        %v356 = vunpack.c.l.b16 %v295
        %v357 = vunpack.c.l.b16 %v296
        %v358 = vunpack.c.l.b16 %v297
        %v359 = vunpack.c.l.b16 %v298
        %v360 = vunpack.c.l.b16 %v299
        %v361 = vunpack.c.l.b16 %v300
        %v362 = vunpack.c.l.b16 %v301
        %v363 = vunpack.c.l.b16 %v302
        %v364 = vunpack.c.l.b16 %v303
        %v365 = vunpack.c.l.b16 %v304
        %v366 = vunpack.c.l.b16 %v305
        %v367 = vunpack.c.l.b16 %v306
        %v368 = vpack.c.b16 %v353, %v352
        %v369 = vpack.c.b16 %v355, %v354
        %v370 = vpack.c.b16 %v357, %v356
        %v371 = vpack.c.b16 %v359, %v358
        %v372 = vpack.c.b16 %v361, %v360
        %v373 = vpack.c.b16 %v363, %v362
        %v374 = vpack.c.b16 %v365, %v364
        %v375 = vpack.c.b16 %v367, %v366
        %384 = vmatprep.subr.bf16.mxu0 0
        %385 = vmatpush1.bf16.msra.mxu0 %v368
        %386 = vmatprep.subr.bf16.mxu0 0
        %387 = vmatpush1.bf16.msra.mxu0 %v369
        %388 = vmatprep.subr.bf16.mxu0 0
        %389 = vmatpush1.bf16.msra.mxu0 %v370
        %390 = vmatprep.subr.bf16.mxu0 0
        %391 = vmatpush1.bf16.msra.mxu0 %v371
        %392 = vmatprep.subr.bf16.mxu0 0
        %393 = vmatpush1.bf16.msra.mxu0 %v372
        %394 = vmatprep.subr.bf16.mxu0 0
        %395 = vmatpush1.bf16.msra.mxu0 %v373
        %396 = vmatprep.subr.bf16.mxu0 0
        %397 = vmatpush1.bf16.msra.mxu0 %v374
        %398 = vmatprep.subr.bf16.mxu0 0
        %399 = vmatpush1.bf16.msra.mxu0 %v375
        %400 = vmatprep.subr.bf16.mxu0 0
        %401 = vmatpush1.bf16.msra.mxu0 0
        %402 = vmatprep.subr.bf16.mxu0 0
        %403 = vmatpush1.bf16.msra.mxu0 0
        %404 = vmatprep.subr.bf16.mxu0 0
        %405 = vmatpush1.bf16.msra.mxu0 0
        %406 = vmatprep.subr.bf16.mxu0 0
        %407 = vmatpush1.bf16.msra.mxu0 0
        %408 = vmatprep.subr.bf16.mxu0 0
        %409 = vmatpush1.bf16.msra.mxu0 0
        %410 = vmatprep.subr.bf16.mxu0 0
        %411 = vmatpush1.bf16.msra.mxu0 0
        %412 = vmatprep.subr.bf16.mxu0 0
        %413 = vmatpush1.bf16.msra.mxu0 0
        %414 = vmatprep.subr.bf16.mxu0 0
        %415 = vmatpush1.bf16.msra.mxu0 0
        %416 = vmatprep.mubr.bf16.mxu0 0
        %417 = vmatmul.mubr.bf16.gmra.mrb[0].mxu0 %v334
        %v418 = vpop.f32.mrb[0].mxu0
        %v419 = vadd.f32 0.0, %v418
        %v420 = vpop.f32.mrb[0].mxu0
        %v421 = vpop.f32.mrb[0].mxu0
        %v422 = vpop.f32.mrb[0].mxu0
        %423 = vdwg.mxu0
        %v424 = vadd.f32 %v325, %v419
        %425 = vst [vmem:[#allocation2] sm:$0x3] %v424
        %p426 = scmp.eq.s32.totalorder %s23, 1
        // Predicated region
        $region57: #{tpu_custom_call.1} parent=39 // pred_check
          %p427 = pneg %p426
        $region58: #{tpu_custom_call.1} parent=39 // pred_check_branch
          %429 = sbr.rel (%p427) target = $region60
        $region59: #{tpu_custom_call.1} parent=39 // pred_region
          %v430 = vld [vmem:[#allocation8] sm:$0xf]
          %v431 = vld [vmem:[#allocation8 + $0x4] sm:$0xf]
          %v432 = vld [vmem:[#allocation8 + $0x8] sm:$0xf]
          %v433 = vld [vmem:[#allocation8 + $0xc] sm:$0xf]
          %v434 = vld [vmem:[#allocation8 + $0x10] sm:$0xf]
          %v435 = vld [vmem:[#allocation8 + $0x14] sm:$0xf]
          %v436 = vld [vmem:[#allocation8 + $0x18] sm:$0xf]
          %v437 = vld [vmem:[#allocation8 + $0x1c] sm:$0xf]
          %v438 = vld [vmem:[#allocation8 + $0x20] sm:$0xf]
          %v439 = vld [vmem:[#allocation8 + $0x24] sm:$0xf]
          %v440 = vld [vmem:[#allocation8 + $0x28] sm:$0xf]
          %v441 = vld [vmem:[#allocation8 + $0x2c] sm:$0xf]
          %v442 = vld [vmem:[#allocation8 + $0x30] sm:$0xf]
          %v443 = vld [vmem:[#allocation8 + $0x34] sm:$0xf]
          %v444 = vld [vmem:[#allocation8 + $0x38] sm:$0xf]
          %v445 = vld [vmem:[#allocation8 + $0x3c] sm:$0xf]
          %v446 = vld [vmem:[#allocation2] sm:$0x3]
          %v447 = vld [vmem:[%s2] sm:$0x1]
          %v449 = vlaneseq
          %v450 = vshrl.u32 %v449, 7
          %v451 = vsub.s32 0, %v450
          %v452 = vrot.slane %v447, %v451
          %v454 = vadd.f32 %v446, %v452
          %v455 = vpack.c.bf16 %v454, %v454
          %v456 = vld [vmem:[%s4] sm:$0x1]
          %v458 = vlaneseq
          %v459 = vshrl.u32 %v458, 7
          %v460 = vsub.s32 0, %v459
          %v461 = vrot.slane %v456, %v460
          %v479 = vunpack.c.l.b16 %v430
          %v480 = vunpack.c.l.b16 %v431
          %v481 = vunpack.c.l.b16 %v432
          %v482 = vunpack.c.l.b16 %v433
          %v483 = vunpack.c.l.b16 %v434
          %v484 = vunpack.c.l.b16 %v435
          %v485 = vunpack.c.l.b16 %v436
          %v486 = vunpack.c.l.b16 %v437
          %v487 = vunpack.c.l.b16 %v438
          %v488 = vunpack.c.l.b16 %v439
          %v489 = vunpack.c.l.b16 %v440
          %v490 = vunpack.c.l.b16 %v441
          %v491 = vunpack.c.l.b16 %v442
          %v492 = vunpack.c.l.b16 %v443
          %v493 = vunpack.c.l.b16 %v444
          %v494 = vunpack.c.l.b16 %v445
          %v495 = vpack.c.b16 %v480, %v479
          %v496 = vpack.c.b16 %v482, %v481
          %v497 = vpack.c.b16 %v484, %v483
          %v498 = vpack.c.b16 %v486, %v485
          %v499 = vpack.c.b16 %v488, %v487
          %v500 = vpack.c.b16 %v490, %v489
          %v501 = vpack.c.b16 %v492, %v491
          %v502 = vpack.c.b16 %v494, %v493
          %511 = vmatprep.subr.bf16.mxu0 0
          %512 = vmatpush1.bf16.msra.mxu0 %v495
          %513 = vmatprep.subr.bf16.mxu0 0
          %514 = vmatpush1.bf16.msra.mxu0 %v496
          %515 = vmatprep.subr.bf16.mxu0 0
          %516 = vmatpush1.bf16.msra.mxu0 %v497
          %517 = vmatprep.subr.bf16.mxu0 0
          %518 = vmatpush1.bf16.msra.mxu0 %v498
          %519 = vmatprep.subr.bf16.mxu0 0
          %520 = vmatpush1.bf16.msra.mxu0 %v499
          %521 = vmatprep.subr.bf16.mxu0 0
          %522 = vmatpush1.bf16.msra.mxu0 %v500
          %523 = vmatprep.subr.bf16.mxu0 0
          %524 = vmatpush1.bf16.msra.mxu0 %v501
          %525 = vmatprep.subr.bf16.mxu0 0
          %526 = vmatpush1.bf16.msra.mxu0 %v502
          %527 = vmatprep.subr.bf16.mxu0 0
          %528 = vmatpush1.bf16.msra.mxu0 0
          %529 = vmatprep.subr.bf16.mxu0 0
          %530 = vmatpush1.bf16.msra.mxu0 0
          %531 = vmatprep.subr.bf16.mxu0 0
          %532 = vmatpush1.bf16.msra.mxu0 0
          %533 = vmatprep.subr.bf16.mxu0 0
          %534 = vmatpush1.bf16.msra.mxu0 0
          %535 = vmatprep.subr.bf16.mxu0 0
          %536 = vmatpush1.bf16.msra.mxu0 0
          %537 = vmatprep.subr.bf16.mxu0 0
          %538 = vmatpush1.bf16.msra.mxu0 0
          %539 = vmatprep.subr.bf16.mxu0 0
          %540 = vmatpush1.bf16.msra.mxu0 0
          %541 = vmatprep.subr.bf16.mxu0 0
          %542 = vmatpush1.bf16.msra.mxu0 0
          %543 = vmatprep.mubr.bf16.mxu0 0
          %544 = vmatmul.mubr.bf16.gmra.mrb[0].mxu0 %v455
          %v545 = vpop.f32.mrb[0].mxu0
          %v546 = vadd.f32 %v461, %v545
          %v547 = vpop.f32.mrb[0].mxu0
          %v548 = vpop.f32.mrb[0].mxu0
          %v549 = vpop.f32.mrb[0].mxu0
          %550 = vdwg.mxu0
          %551 = vst [vmem:[#allocation9] sm:$0x3] %v546
        $region60: #{tpu_custom_call.1} parent=39 // pred_fallthru
          _
        // Predicated region
        $region61: #{tpu_custom_call.1} parent=39 // pred_check
          %p552 = pneg %p151
        $region62: #{tpu_custom_call.1} parent=39 // pred_check_branch
          %554 = sbr.rel (%p552) target = $region64
        $region63: #{tpu_custom_call.1} parent=39 // pred_region
          %s556 = ssub.s32 32, 32
          %557 = vsyncadd [#allocation5], %s556
          %s559 = sshll.u32 [#allocation9], 4
          %s560 = int_to_ptr.vmem [resolvable:$true] %s559
          %562 = dma.vmem_to_hbm [thread:$0]  %s560, 32, %s5, [#allocation5]
        $region64: #{tpu_custom_call.1} parent=39 // pred_fallthru
          _
        // Predicated region
        $region65: #{tpu_custom_call.1} parent=39 // pred_check
          %p563 = pneg %p151
        $region66: #{tpu_custom_call.1} parent=39 // pred_check_branch
          %565 = sbr.rel (%p563) target = $region68
        $region67: #{tpu_custom_call.1} parent=39 // pred_region
          %566 = dma.done [#allocation5], 32
        $region68: #{tpu_custom_call.1} parent=39 // pred_fallthru
          _
      $region40: #{tpu_custom_call.1} parent=5 // pred_fallthru
        _
      %p567 = scmp.le.s32.totalorder 2, %s18
      // Predicated region
      $region69: #{tpu_custom_call.1} parent=5 // pred_check
        %p568 = pneg %p567
      $region70: #{tpu_custom_call.1} parent=5 // pred_check_branch
        %570 = sbr.rel (%p568) target = $region72
      $region71: #{tpu_custom_call.1} parent=5 // pred_region
        %s571 = ssub.s32 %s18, 2
      $region72: #{tpu_custom_call.1} parent=5 // pred_fallthru
        _
    $region6: #{tpu_custom_call.1} parent=1 // loop_footer
      %s22 = sadd.s32 1, %s18
    $region7: #{tpu_custom_call.1} parent=1 // loop_footer_branch
      %17 = sbr.rel target = $region3
    $region8: #{tpu_custom_call.1} parent=1 // loop_exit
      _
    %572 = vsyncpa [#allocation4], 1
    %s573 = scalar_lea.sflag [#allocation4], 1
    %574 = vsyncpa %s573, 1
    %575 = vsyncpa [#allocation7], 1
    %s576 = scalar_lea.sflag [#allocation7], 1
    %577 = vsyncpa %s576, 1
    %578 = vsyncpa [#allocation5], 1
    %s579 = scalar_lea.sflag [#allocation5], 1
    %580 = vsyncpa %s579, 1

</llo_original>
